<compile_context>
chip_gen: v7x
topology: tpu7x:2x2x1
jax: 0.10.0
libtpu: 0.0.40
codegen_flags: <defaults>
</compile_context>

<pallas_src>
import functools

import jax
import jax.numpy as jnp
from jax import lax
from jax.experimental import pallas as pl
from jax.experimental.pallas import tpu as pltpu

EPSILON = 1e-15


# ----------------------------------------------------------------------------
# Hardware detection (import time, with safe fallbacks).
# ----------------------------------------------------------------------------
def _detect_tpu():
    vmem_cap = 128 << 20   # v5e / v6e physical VMEM per TensorCore
    n_tc = 1               # TensorCores per chip (v7x has 2)
    try:
        kind = jax.devices()[0].device_kind.lower()
        if "v7" in kind:
            vmem_cap, n_tc = 64 << 20, 2
    except Exception:
        pass
    try:
        vmem_cap = int(pltpu.get_tpu_info().vmem_capacity_bytes)
    except Exception:
        pass
    return vmem_cap, n_tc


_VMEM_CAP, _NUM_TC = _detect_tpu()
# Usable scoped-VMEM budget: ~96 MiB on v5e/v6e (128 MiB physical),
# ~48 MiB on v7x (64 MiB physical).
_VMEM_USABLE = min((3 * _VMEM_CAP) // 4, 96 << 20)


# ----------------------------------------------------------------------------
# Kernel
# ----------------------------------------------------------------------------
def _ordinal_kernel(x_ref, wt_ref, b_ref, thr_ref, out_ref, *, num_t):
    """One batch tile, transposed (lane-dense) layout.

    x_ref:   [TILE_B, H]     streamed activations
    wt_ref:  [C, H]          fused classifier weights (row C-1 is zeros)
    b_ref:   [C, 1]          fused biases             (row C-1 is zero)
    thr_ref: [C, 1]          thresholds               (row C-1 is +30 -> sigmoid==1)
    out_ref: [T + C, TILE_B] fused output: rows [0:T] = logits^T,
                             rows [T:T+C] = probas^T
    """
    x = x_ref[...]                # [TILE_B, H]
    wt = wt_ref[...]              # [C, H]

    # Lane-dense matmul on the MXU: contract the hidden axis of both operands
    # (the transpose-free "q @ k.T" contraction pattern) -> [C, TILE_B].
    logits_ext = lax.dot_general(
        wt, x,
        dimension_numbers=(((1,), (1,)), ((), ())),
        preferred_element_type=jnp.float32,
    ) + b_ref[...]                # [C, TILE_B]

    # sig[c] = sigmoid(threshold[c] - logit[c]); the padded row is exactly 1.0
    # in f32 (sigmoid(+30) rounds to 1.0).
    sig = jax.nn.sigmoid(thr_ref[...] - logits_ext)            # [C, TILE_B]

    # probas[c] = sig[c] - sig[c-1], with sig[-1] := 0 — a sublane shift at
    # full lane width instead of a lane-axis concat of tiny slices.
    zero_row = jnp.zeros_like(sig[:1, :])
    sig_lo = jnp.concatenate([zero_row, sig[:-1, :]], axis=0)  # [C, TILE_B]
    probas = jnp.clip(sig - sig_lo, EPSILON, 1.0 - EPSILON)

    # Single fused, lane-dense store: [logits^T ; probas^T].
    out_ref[...] = jnp.concatenate(
        [logits_ext[:num_t, :], probas], axis=0).astype(out_ref.dtype)


# ----------------------------------------------------------------------------
# Tiling heuristic
# ----------------------------------------------------------------------------
def _choose_batch_tile(batch, hidden, num_t, num_c):
    """Bytes-based batch tile (multiple of 128), generation-aware."""
    if batch <= 128:
        return batch                       # full-extent block, no padding
    h_pad = max(hidden, 128)               # minor dim lane-pads to 128 in VMEM
    out_rows_pad = 8 * ((num_t + num_c + 7) // 8)

    # Target an ~8 MiB x tile per grid step so the per-step overhead (~0.35 us)
    # is amortized against the dominant HBM stream.
    target_rows = (8 << 20) // (4 * h_pad)

    # VMEM ceiling: double-buffered x + double-buffered fused output +
    # ~8 x [8, tile_b] f32 epilogue temporaries (weights are negligible).
    per_row_bytes = 4 * (2 * h_pad + 2 * out_rows_pad + 8 * 8)
    vmem_rows = max(128, (_VMEM_USABLE - (4 << 20)) // per_row_bytes)

    tile = min(target_rows, vmem_rows, batch)

    # v7x: keep >=2 (ideally 4) grid steps so both TensorCores get work.
    if _NUM_TC > 1:
        min_steps = 2 * _NUM_TC if batch >= 2 * _NUM_TC * 128 else _NUM_TC
        if batch >= min_steps * 128:
            tile = min(tile, batch // min_steps)

    return max(128, (tile // 128) * 128)


# ----------------------------------------------------------------------------
# Wrapper
# ----------------------------------------------------------------------------
@functools.partial(jax.jit, static_argnames=("tile_rows",))
def ordinal_regression(x, w, b, thresholds, *, tile_rows=None):
    """Fused OrdinalRegression forward.

    Args:
      x:          [B, H] float32 activations.
      w:          [H, T] float32 — the T Linear(H, 1) classifier weights, fused.
      b:          [1, T] (or [T]) float32 fused biases.
      thresholds: [1, T] (or [T]) float32 cutpoints.
      tile_rows:  optional static override of the batch tile (testing).
    Returns:
      (logits [B, T], probas [B, T+1]) — same semantics as the PyTorch module.
    """
    batch, hidden = x.shape
    num_t = w.shape[1]          # T = num_classes - 1
    num_c = num_t + 1           # C = num_classes
    fused_rows = num_t + num_c  # fused output rows

    bias = jnp.reshape(b, (num_t,)).astype(jnp.float32)
    thr = jnp.reshape(thresholds, (num_t,)).astype(jnp.float32)

    # Pad the class axis with a virtual "always true" classifier:
    #   w = 0, bias = 0, threshold = +30  =>  sigmoid(+30 - 0) == 1.0 in f32.
    wt_p = jnp.concatenate(
        [w.astype(jnp.float32).T, jnp.zeros((1, hidden), jnp.float32)], axis=0)  # [C, H]
    b_p = jnp.concatenate([bias, jnp.zeros((1,), jnp.float32)])[:, None]          # [C, 1]
    thr_p = jnp.concatenate([thr, jnp.full((1,), 30.0, jnp.float32)])[:, None]    # [C, 1]

    # Batch tile and padding.
    if tile_rows is not None:
        tile_b = int(tile_rows)
    else:
        tile_b = _choose_batch_tile(batch, hidden, num_t, num_c)
    b_pad = -(-batch // tile_b) * tile_b
    x_p = x if b_pad == batch else jnp.pad(x, ((0, b_pad - batch), (0, 0)))
    grid = (b_pad // tile_b,)

    # Scoped VMEM: correct footprint math (lane-padded x blocks + fused output
    # + epilogue temporaries), always set explicitly (v5e default is 16 MiB),
    # clamped to the generation-aware usable budget.
    h_pad = max(hidden, 128)
    out_rows_pad = 8 * ((fused_rows + 7) // 8)
    vmem_need = (2 * tile_b * h_pad * 4                 # double-buffered x stream
                 + (num_c * h_pad + 8 * num_c) * 4      # resident W^T / bias / thr
                 + 2 * out_rows_pad * tile_b * 4        # double-buffered fused output
                 + 8 * 8 * tile_b * 4                   # [C, tile_b] f32 temporaries
                 + (2 << 20))                           # headroom
    vmem_limit = int(min(max(vmem_need, 16 << 20), _VMEM_USABLE))

    cost = pl.CostEstimate(
        flops=2 * b_pad * hidden * num_c,
        transcendentals=b_pad * num_c,
        bytes_accessed=4 * (b_pad * hidden + num_c * (hidden + 2)
                            + b_pad * fused_rows),
    )

    fused = pl.pallas_call(
        functools.partial(_ordinal_kernel, num_t=num_t),
        out_shape=jax.ShapeDtypeStruct((fused_rows, b_pad), jnp.float32),
        grid=grid,
        in_specs=[
            pl.BlockSpec((tile_b, hidden), lambda i: (i, 0)),    # x: streamed over batch
            pl.BlockSpec((num_c, hidden), lambda i: (0, 0)),     # W^T: VMEM-resident
            pl.BlockSpec((num_c, 1), lambda i: (0, 0)),          # bias: resident
            pl.BlockSpec((num_c, 1), lambda i: (0, 0)),          # thresholds: resident
        ],
        out_specs=pl.BlockSpec((fused_rows, tile_b), lambda i: (0, i)),
        compiler_params=pltpu.CompilerParams(
            dimension_semantics=("parallel",),
            vmem_limit_bytes=vmem_limit,
        ),
        cost_estimate=cost,
    )(x_p, wt_p, b_p, thr_p)

    # Back to the PyTorch layout with a single small transpose pass
    # (outputs are tiny: T + C << H columns per row).
    fused_t = fused[:, :batch].T            # [B, T + C]
    logits = fused_t[:, :num_t]
    probas = fused_t[:, num_t:]
    return logits, probas


# ----------------------------------------------------------------------------
# Pure-JAX reference (matches the PyTorch module)
# ----------------------------------------------------------------------------
def _reference(x, w, b, thresholds):
    logits = x @ w + b
    sig = jax.nn.sigmoid(thresholds - logits)
    probas = jnp.concatenate(
        [sig[:, :1], sig[:, 1:] - sig[:, :-1], 1.0 - sig[:, -1:]], axis=1)
    return logits, jnp.clip(probas, EPSILON, 1.0 - EPSILON)


if __name__ == "__main__":
    # Small, deterministic setup consistent with the module's __init__.
    num_classes = 3
    hidden_size = 32
    scale = 20.0
    num_thresholds = num_classes - 1

    key = jax.random.PRNGKey(0)
    kx, kw, kb = jax.random.split(key, 3)

    batch = 256
    x = jax.random.normal(kx, (batch, hidden_size), dtype=jnp.float32)
    # Fused weights of the T Linear(hidden, 1) classifiers: [H, T]
    w = jax.random.normal(kw, (hidden_size, num_thresholds),
                          dtype=jnp.float32) * 0.05
    b = jax.random.normal(kb, (1, num_thresholds), dtype=jnp.float32) * 0.05
    # thresholds = arange(T) * scale / (num_classes - 2) - scale / 2
    thr = (jnp.arange(num_thresholds, dtype=jnp.float32) * scale
           / (num_classes - 2) - scale / 2).reshape(1, num_thresholds)

    logits, probas = ordinal_regression(x, w, b, thr)
    jax.block_until_ready((logits, probas))

    ref_logits, ref_probas = _reference(x, w, b, thr)
    assert logits.shape == (batch, num_thresholds)
    assert probas.shape == (batch, num_classes)
    assert jnp.allclose(logits, ref_logits, atol=1e-5, rtol=1e-5)
    assert jnp.allclose(probas, ref_probas, atol=1e-5, rtol=1e-5)

    # Exercise the multi-step batch grid + padding path (300 rows, 128-row tiles).
    batch2 = 300
    x2 = jax.random.normal(jax.random.PRNGKey(1), (batch2, hidden_size),
                           dtype=jnp.float32)
    logits2, probas2 = ordinal_regression(x2, w, b, thr, tile_rows=128)
    jax.block_until_ready((logits2, probas2))
    ref_logits2, ref_probas2 = _reference(x2, w, b, thr)
    assert logits2.shape == (batch2, num_thresholds)
    assert probas2.shape == (batch2, num_classes)
    assert jnp.allclose(logits2, ref_logits2, atol=1e-5, rtol=1e-5)
    assert jnp.allclose(probas2, ref_probas2, atol=1e-5, rtol=1e-5)

    print("KERNEL_OK")
</pallas_src>

<mosaic_0001>
module attributes {stable_mosaic.version = 11 : i64} {
  func.func @_ordinal_kernel(%arg0: i32, %arg1: memref<256x32xf32, #tpu.memory_space<vmem>>, %arg2: memref<3x32xf32, #tpu.memory_space<vmem>>, %arg3: memref<3x1xf32, #tpu.memory_space<vmem>>, %arg4: memref<3x1xf32, #tpu.memory_space<vmem>>, %arg5: memref<5x256xf32, #tpu.memory_space<vmem>>) attributes {dimension_semantics = [#tpu.dimension_semantics<parallel>], iteration_bounds = array<i64: 1>, scalar_prefetch = 0 : i64, scratch_operands = 0 : i64, tpu.core_type = #tpu.core_type<tc>, window_params = [{transform_indices = @transform_0, window_bounds = array<i64: 256, 32>}, {pipeline_mode = #tpu.pipeline_mode<synchronous>, transform_indices = @transform_1, window_bounds = array<i64: 3, 32>}, {pipeline_mode = #tpu.pipeline_mode<synchronous>, transform_indices = @transform_2, window_bounds = array<i64: 3, 1>}, {pipeline_mode = #tpu.pipeline_mode<synchronous>, transform_indices = @transform_3, window_bounds = array<i64: 3, 1>}, {transform_indices = @transform_4, window_bounds = array<i64: 5, 256>}]} {
    %c0 = arith.constant 0 : index
    %c0_0 = arith.constant 0 : index
    %0 = vector.load %arg1[%c0, %c0_0] : memref<256x32xf32, #tpu.memory_space<vmem>>, vector<256x32xf32>
    %c0_1 = arith.constant 0 : index
    %c0_2 = arith.constant 0 : index
    %1 = vector.load %arg2[%c0_1, %c0_2] : memref<3x32xf32, #tpu.memory_space<vmem>>, vector<3x32xf32>
    %cst = arith.constant dense<0.000000e+00> : vector<3x256xf32>
    %2 = tpu.matmul %1, %0, %cst {dimension_numbers = #tpu.dot_dimension_numbers<[1], [1], [0], [0], [0, 0, 1, 0], [], []>} : vector<3x32xf32>, vector<256x32xf32>, vector<3x256xf32> -> vector<3x256xf32>
    %c0_3 = arith.constant 0 : index
    %c0_4 = arith.constant 0 : index
    %3 = vector.load %arg3[%c0_3, %c0_4] : memref<3x1xf32, #tpu.memory_space<vmem>>, vector<3x1xf32>
    %4 = vector.broadcast %3 : vector<3x1xf32> to vector<3x256xf32>
    %5 = arith.addf %2, %4 : vector<3x256xf32>
    %c0_5 = arith.constant 0 : index
    %c0_6 = arith.constant 0 : index
    %6 = vector.load %arg4[%c0_5, %c0_6] : memref<3x1xf32, #tpu.memory_space<vmem>>, vector<3x1xf32>
    %7 = vector.broadcast %6 : vector<3x1xf32> to vector<3x256xf32>
    %8 = arith.subf %7, %5 : vector<3x256xf32>
    %9 = arith.negf %8 : vector<3x256xf32>
    %10 = math.exp %9 : vector<3x256xf32>
    %cst_7 = arith.constant 1.000000e+00 : f32
    %11 = vector.broadcast %cst_7 : f32 to vector<3x256xf32>
    %12 = arith.addf %11, %10 : vector<3x256xf32>
    %13 = arith.divf %11, %12 : vector<3x256xf32>
    %cst_8 = arith.constant 0.000000e+00 : f32
    %14 = vector.broadcast %cst_8 : f32 to vector<1x256xf32>
    %15 = vector.extract_strided_slice %13 {offsets = [0, 0], sizes = [2, 256], strides = [1, 1]} : vector<3x256xf32> to vector<2x256xf32>
    %16 = tpu.concatenate %14, %15 in 0 : vector<1x256xf32>, vector<2x256xf32> -> vector<3x256xf32>
    %17 = arith.subf %13, %16 : vector<3x256xf32>
    %cst_9 = arith.constant 1.000000e-15 : f32
    %cst_10 = arith.constant 1.000000e+00 : f32
    %18 = vector.broadcast %cst_9 : f32 to vector<3x256xf32>
    %19 = arith.maximumf %18, %17 : vector<3x256xf32>
    %20 = vector.broadcast %cst_10 : f32 to vector<3x256xf32>
    %21 = arith.minimumf %20, %19 : vector<3x256xf32>
    %22 = vector.extract_strided_slice %5 {offsets = [0, 0], sizes = [2, 256], strides = [1, 1]} : vector<3x256xf32> to vector<2x256xf32>
    %23 = tpu.concatenate %22, %21 in 0 : vector<2x256xf32>, vector<3x256xf32> -> vector<5x256xf32>
    %c0_11 = arith.constant 0 : index
    %c0_12 = arith.constant 0 : index
    %24 = vector.load %arg5[%c0_11, %c0_12] : memref<5x256xf32, #tpu.memory_space<vmem>>, vector<5x256xf32>
    tpu.vector_store %arg5[%c0_11, %c0_12], %23 {strides = array<i32>} : memref<5x256xf32, #tpu.memory_space<vmem>>, vector<5x256xf32>,
    return
  }
  func.func @transform_0(%arg0: i32) -> (i32, i32) {
    %c0_i32 = arith.constant 0 : i32
    %c0_i32_0 = arith.constant 0 : i32
    return %arg0, %c0_i32 : i32, i32
  }
  func.func @transform_1(%arg0: i32) -> (i32, i32) {
    %c0_i32 = arith.constant 0 : i32
    %c0_i32_0 = arith.constant 0 : i32
    %c0_i32_1 = arith.constant 0 : i32
    return %c0_i32, %c0_i32_0 : i32, i32
  }
  func.func @transform_2(%arg0: i32) -> (i32, i32) {
    %c0_i32 = arith.constant 0 : i32
    %c0_i32_0 = arith.constant 0 : i32
    %c0_i32_1 = arith.constant 0 : i32
    return %c0_i32, %c0_i32_0 : i32, i32
  }
  func.func @transform_3(%arg0: i32) -> (i32, i32) {
    %c0_i32 = arith.constant 0 : i32
    %c0_i32_0 = arith.constant 0 : i32
    %c0_i32_1 = arith.constant 0 : i32
    return %c0_i32, %c0_i32_0 : i32, i32
  }
  func.func @transform_4(%arg0: i32) -> (i32, i32) {
    %c0_i32 = arith.constant 0 : i32
    %c0_i32_0 = arith.constant 0 : i32
    return %c0_i32, %arg0 : i32, i32
  }
}

</mosaic_0001>

<llo_original>
// kernel: ordinal_regression.1
$region0: #{ordinal_regression.1}
  #allocation0 [shape = 'u32[]', space=smem, size = 0x4, offset = 0x4, fixed_abs, tag = 'smem constant byte address 0x4 - core index']
  #allocation1 [shape = 'u32[144,128]{1,0:T(1,128)}', space=vmem, size = 0x12000, scoped, tag = 'internal scratch']
  %s0 = inlined_call_operand.vmem [shape: f32[256,32], index: 0, kind: input, shape index: {}]
  %s1 = inlined_call_operand.vmem [shape: f32[3,32], index: 1, kind: input, shape index: {}]
  %s2 = inlined_call_operand.vmem [shape: f32[3,1], index: 2, kind: input, shape index: {}]
  %s3 = inlined_call_operand.vmem [shape: f32[3,1], index: 3, kind: input, shape index: {}]
  %s4 = inlined_call_operand.vmem [shape: f32[5,256], index: 4, kind: output, shape index: {}]
  %s5 = sld [smem:[#allocation0]]
  $region26: #{ordinal_regression.1} parent=0
    _
  %s7 = ssub.s32 1, %s5
  %s8 = scalar_select 0, %s7, %s5
  // Predicated region
  $region2: #{ordinal_regression.1} parent=0 // pred_check
    _
  $region3: #{ordinal_regression.1} parent=0 // pred_check_branch
    %10 = sbr.rel (0) target = $region5
  $region4: #{ordinal_regression.1} parent=0 // pred_region
    _
  $region5: #{ordinal_regression.1} parent=0 // pred_fallthru
    _
  // Predicated region
  $region6: #{ordinal_regression.1} parent=0 // pred_check
    _
  $region7: #{ordinal_regression.1} parent=0 // pred_check_branch
    %12 = sbr.rel (0) target = $region9
  $region8: #{ordinal_regression.1} parent=0 // pred_region
    _
  $region9: #{ordinal_regression.1} parent=0 // pred_fallthru
    _
  // Predicated region
  $region10: #{ordinal_regression.1} parent=0 // pred_check
    _
  $region11: #{ordinal_regression.1} parent=0 // pred_check_branch
    %14 = sbr.rel (0) target = $region13
  $region12: #{ordinal_regression.1} parent=0 // pred_region
    _
  $region13: #{ordinal_regression.1} parent=0 // pred_fallthru
    _
  // Predicated region
  $region14: #{ordinal_regression.1} parent=0 // pred_check
    _
  $region15: #{ordinal_regression.1} parent=0 // pred_check_branch
    %16 = sbr.rel (0) target = $region17
  $region16: #{ordinal_regression.1} parent=0 // pred_region
    _
  $region17: #{ordinal_regression.1} parent=0 // pred_fallthru
    _
  %v17 = vld [vmem:[%s0] sm:$0xff]
  %v18 = vld [vmem:[%s0 + $0x8] sm:$0xff]
  %v19 = vld [vmem:[%s0 + $0x10] sm:$0xff]
  %v20 = vld [vmem:[%s0 + $0x18] sm:$0xff]
  %v21 = vld [vmem:[%s0 + $0x20] sm:$0xff]
  %v22 = vld [vmem:[%s0 + $0x28] sm:$0xff]
  %v23 = vld [vmem:[%s0 + $0x30] sm:$0xff]
  %v24 = vld [vmem:[%s0 + $0x38] sm:$0xff]
  %v25 = vld [vmem:[%s0 + $0x40] sm:$0xff]
  %v26 = vld [vmem:[%s0 + $0x48] sm:$0xff]
  %v27 = vld [vmem:[%s0 + $0x50] sm:$0xff]
  %v28 = vld [vmem:[%s0 + $0x58] sm:$0xff]
  %v29 = vld [vmem:[%s0 + $0x60] sm:$0xff]
  %v30 = vld [vmem:[%s0 + $0x68] sm:$0xff]
  %v31 = vld [vmem:[%s0 + $0x70] sm:$0xff]
  %v32 = vld [vmem:[%s0 + $0x78] sm:$0xff]
  %v33 = vld [vmem:[%s0 + $0x80] sm:$0xff]
  %v34 = vld [vmem:[%s0 + $0x88] sm:$0xff]
  %v35 = vld [vmem:[%s0 + $0x90] sm:$0xff]
  %v36 = vld [vmem:[%s0 + $0x98] sm:$0xff]
  %v37 = vld [vmem:[%s0 + $0xa0] sm:$0xff]
  %v38 = vld [vmem:[%s0 + $0xa8] sm:$0xff]
  %v39 = vld [vmem:[%s0 + $0xb0] sm:$0xff]
  %v40 = vld [vmem:[%s0 + $0xb8] sm:$0xff]
  %v41 = vld [vmem:[%s0 + $0xc0] sm:$0xff]
  %v42 = vld [vmem:[%s0 + $0xc8] sm:$0xff]
  %v43 = vld [vmem:[%s0 + $0xd0] sm:$0xff]
  %v44 = vld [vmem:[%s0 + $0xd8] sm:$0xff]
  %v45 = vld [vmem:[%s0 + $0xe0] sm:$0xff]
  %v46 = vld [vmem:[%s0 + $0xe8] sm:$0xff]
  %v47 = vld [vmem:[%s0 + $0xf0] sm:$0xff]
  %v48 = vld [vmem:[%s0 + $0xf8] sm:$0xff]
  %v49 = vld [vmem:[%s1] sm:$0x7]
  %v50 = vld [vmem:[%s2] sm:$0x7]
  %52 = vset.pattern.permute.xlu0 0
  %53 = vperm.xlu0 %52, %v50
  %v54 = vpop.permute.xlu0 %53
  %vm56 = vcmask 261120
  %v58 = vsel %vm56, %v49, 0
  %v61 = vsel %vm56, %v17, 0
  %v64 = vsel %vm56, %v18, 0
  %v67 = vsel %vm56, %v19, 0
  %v70 = vsel %vm56, %v20, 0
  %v73 = vsel %vm56, %v21, 0
  %v76 = vsel %vm56, %v22, 0
  %v79 = vsel %vm56, %v23, 0
  %v82 = vsel %vm56, %v24, 0
  %v85 = vsel %vm56, %v25, 0
  %v88 = vsel %vm56, %v26, 0
  %v91 = vsel %vm56, %v27, 0
  %v94 = vsel %vm56, %v28, 0
  %v97 = vsel %vm56, %v29, 0
  %v100 = vsel %vm56, %v30, 0
  %v103 = vsel %vm56, %v31, 0
  %v106 = vsel %vm56, %v32, 0
  %v109 = vsel %vm56, %v33, 0
  %v112 = vsel %vm56, %v34, 0
  %v115 = vsel %vm56, %v35, 0
  %v118 = vsel %vm56, %v36, 0
  %v121 = vsel %vm56, %v37, 0
  %v124 = vsel %vm56, %v38, 0
  %v127 = vsel %vm56, %v39, 0
  %v130 = vsel %vm56, %v40, 0
  %v133 = vsel %vm56, %v41, 0
  %v136 = vsel %vm56, %v42, 0
  %v139 = vsel %vm56, %v43, 0
  %v142 = vsel %vm56, %v44, 0
  %v145 = vsel %vm56, %v45, 0
  %v148 = vsel %vm56, %v46, 0
  %v151 = vsel %vm56, %v47, 0
  %v154 = vsel %vm56, %v48, 0
  %156 = vmatprep.subr.mxu0 0.0
  %157 = vmatpush1.xpose.msra.mxu0 %v61
  %158 = vmatprep.subr.mxu0 0.0
  %159 = vmatpush1.xpose.msra.mxu0 %v64
  %160 = vmatprep.subr.mxu0 0.0
  %161 = vmatpush1.xpose.msra.mxu0 %v67
  %162 = vmatprep.subr.mxu0 0.0
  %163 = vmatpush1.xpose.msra.mxu0 %v70
  %164 = vmatprep.subr.mxu0 0.0
  %165 = vmatpush1.xpose.msra.mxu0 %v73
  %166 = vmatprep.subr.mxu0 0.0
  %167 = vmatpush1.xpose.msra.mxu0 %v76
  %168 = vmatprep.subr.mxu0 0.0
  %169 = vmatpush1.xpose.msra.mxu0 %v79
  %170 = vmatprep.subr.mxu0 0.0
  %171 = vmatpush1.xpose.msra.mxu0 %v82
  %172 = vmatprep.subr.mxu0 0.0
  %173 = vmatpush1.xpose.msra.mxu0 %v85
  %174 = vmatprep.subr.mxu0 0.0
  %175 = vmatpush1.xpose.msra.mxu0 %v88
  %176 = vmatprep.subr.mxu0 0.0
  %177 = vmatpush1.xpose.msra.mxu0 %v91
  %178 = vmatprep.subr.mxu0 0.0
  %179 = vmatpush1.xpose.msra.mxu0 %v94
  %180 = vmatprep.subr.mxu0 0.0
  %181 = vmatpush1.xpose.msra.mxu0 %v97
  %182 = vmatprep.subr.mxu0 0.0
  %183 = vmatpush1.xpose.msra.mxu0 %v100
  %184 = vmatprep.subr.mxu0 0.0
  %185 = vmatpush1.xpose.msra.mxu0 %v103
  %186 = vmatprep.subr.mxu0 0.0
  %187 = vmatpush1.xpose.msra.mxu0 %v106
  %188 = vmatprep.subr.mxu0 0.0
  %189 = vmatpush1.xpose.msra.mxu0 %v109
  %190 = vmatprep.subr.mxu0 0.0
  %191 = vmatpush1.xpose.msra.mxu0 %v112
  %192 = vmatprep.subr.mxu0 0.0
  %193 = vmatpush1.xpose.msra.mxu0 %v115
  %194 = vmatprep.subr.mxu0 0.0
  %195 = vmatpush1.xpose.msra.mxu0 %v118
  %196 = vmatprep.subr.mxu0 0.0
  %197 = vmatpush1.xpose.msra.mxu0 %v121
  %198 = vmatprep.subr.mxu0 0.0
  %199 = vmatpush1.xpose.msra.mxu0 %v124
  %200 = vmatprep.subr.mxu0 0.0
  %201 = vmatpush1.xpose.msra.mxu0 %v127
  %202 = vmatprep.subr.mxu0 0.0
  %203 = vmatpush1.xpose.msra.mxu0 %v130
  %204 = vmatprep.subr.mxu0 0.0
  %205 = vmatpush1.xpose.msra.mxu0 %v133
  %206 = vmatprep.subr.mxu0 0.0
  %207 = vmatpush1.xpose.msra.mxu0 %v136
  %208 = vmatprep.subr.mxu0 0.0
  %209 = vmatpush1.xpose.msra.mxu0 %v139
  %210 = vmatprep.subr.mxu0 0.0
  %211 = vmatpush1.xpose.msra.mxu0 %v142
  %212 = vmatprep.subr.mxu0 0.0
  %213 = vmatpush1.xpose.msra.mxu0 %v145
  %214 = vmatprep.subr.mxu0 0.0
  %215 = vmatpush1.xpose.msra.mxu0 %v148
  %216 = vmatprep.subr.mxu0 0.0
  %217 = vmatpush1.xpose.msra.mxu0 %v151
  %218 = vmatprep.subr.mxu0 0.0
  %219 = vmatpush1.xpose.msra.mxu0 %v154
  %220 = vmatprep.mubr.f32.mxu0 0.0
  %221 = vmatmul.mubr.f32.gmra.mrb[0].mxu0 %v58
  %v222 = vpop.f32.mrb[0].mxu0
  %v223 = vadd.f32 %v54, %v222
  %v224 = vpop.f32.mrb[0].mxu0
  %v225 = vadd.f32 %v54, %v224
  %226 = vdwg.mxu0
  %v227 = vld [vmem:[%s3] sm:$0x7]
  %229 = vset.pattern.permute.xlu0 0
  %230 = vperm.xlu0 %229, %v227
  %v231 = vpop.permute.xlu0 %230
  %v233 = vsub.f32 %v231, %v223
  %v234 = vsub.f32 %v231, %v225
  %v235 = vxor.u32 %v233, 2147483648
  %v236 = vxor.u32 %v234, 2147483648
  %v237 = vmul.f32 %v235, 1.442695
  %v238 = vpow.pop %v237
  %v239 = vmul.f32 %v236, 1.442695
  %v240 = vpow.pop %v239
  %v241 = vadd.f32 %v238, 1.0
  %v242 = vadd.f32 %v240, 1.0
  %v243 = vrcp.pop %v241
  %v244 = vmul.f32 1.0, %v243
  %v245 = vrcp.pop %v242
  %v246 = vmul.f32 1.0, %v245
  %v249 = vrot.slane %v244, 7
  %v250 = vrot.slane %v246, 7
  %vm253 = vcmask 1040384
  %v254 = vsel %vm253, 0.0, %v249
  %v255 = vsel %vm253, 0.0, %v250
  %v256 = vsub.f32 %v244, %v254
  %v257 = vsub.f32 %v246, %v255
  %v258 = vmax.f32 %v256, 1e-15
  %v259 = vmax.f32 %v257, 1e-15
  %v260 = vmin.f32 %v258, 1.0
  %v261 = vmin.f32 %v259, 1.0
  %v264 = vrot.slane %v260, 6
  %v265 = vrot.slane %v261, 6
  %vm268 = vcmask 1041408
  %v269 = vsel %vm268, %v223, %v264
  %v270 = vsel %vm268, %v225, %v265
  %271 = vst [vmem:[%s4] sm:$0x1f] %v269
  %272 = vst [vmem:[%s4 + $0x8] sm:$0x1f] %v270
  // Predicated region
  $region18: #{ordinal_regression.1} parent=0 // pred_check
    _
  $region19: #{ordinal_regression.1} parent=0 // pred_check_branch
    %274 = sbr.rel (0) target = $region21
  $region20: #{ordinal_regression.1} parent=0 // pred_region
    _
  $region21: #{ordinal_regression.1} parent=0 // pred_fallthru
    _
  // Predicated region
  $region22: #{ordinal_regression.1} parent=0 // pred_check
    _
  $region23: #{ordinal_regression.1} parent=0 // pred_check_branch
    %276 = sbr.rel (0) target = $region25
  $region24: #{ordinal_regression.1} parent=0 // pred_region
    _
  $region25: #{ordinal_regression.1} parent=0 // pred_fallthru
    _

</llo_original>
